<compile_context>
chip_gen: v7x
topology: tpu7x:2x2x1
jax: 0.10.0
libtpu: 0.0.40
codegen_flags: <defaults>
</compile_context>

<pallas_src>
import jax
import jax.numpy as jnp
from jax.experimental import pallas as pl
from jax.experimental.pallas import tpu as pltpu


def _pad128(n: int) -> int:
    return ((n + 127) // 128) * 128


def _round8(n: int) -> int:
    return max(8, ((n + 7) // 8) * 8)


def _make_policy_kernel(n_layers):
    """Fused MLP(+ReLU) + softmax kernel.

    Ref order: (s, W1, b1, W2, b2, ..., Wn, bn, out)
      s   : (tile_b, state_dim)   true (unpadded) feature width
      Wi  : (in_w, out_w)         hidden out widths padded to 128 lanes
      bi  : (1, out_w)            broadcast row (loaded once per tile)
      out : (tile_b, action_dim)  true (unpadded) action width
    Padded hidden columns stay exactly 0 (zero W columns + zero bias + ReLU) and
    the padded rows of the next W are zero, so the result is exact.
    """

    def kernel(*refs):
        s_ref = refs[0]
        out_ref = refs[-1]

        x = s_ref[...].astype(jnp.float32)
        for i in range(n_layers):
            w = refs[1 + 2 * i][...]
            b = refs[2 + 2 * i][...].astype(jnp.float32)          # (1, out) row
            xw = x if w.dtype == x.dtype else x.astype(w.dtype)   # bf16-weight path
            x = jnp.dot(xw, w, preferred_element_type=jnp.float32) + b
            if i < n_layers - 1:                                  # ReLU on hidden only
                x = jnp.maximum(x, 0.0)

        # Numerically stable softmax over the true action_dim lanes.
        m = jnp.max(x, axis=-1, keepdims=True)
        e = jnp.exp(x - m)
        denom = jnp.sum(e, axis=-1, keepdims=True)
        inv = pl.reciprocal(denom, approx=True)                   # EUP slot, not VALU
        inv = inv * (2.0 - denom * inv)                           # Newton step, <1e-7 rel
        out_ref[...] = (e * inv).astype(out_ref.dtype)

    return kernel


def prepare_policy_params(params, param_dtype=jnp.float32):
    """Pad/cast the (W, b) params ONCE; reuse the result across forward calls.

    params: list of (W, b) with W shape (in, out) (transpose of PyTorch's
    (out, in) weight) and b shape (out,).  Only hidden output (lane) dims are
    padded to 128; layer-1 keeps K = state_dim and the last layer keeps
    N = action_dim, so the activations never need HBM-side padding.
    """
    n_layers = len(params)
    sizes = [params[0][0].shape[0]] + [w.shape[1] for (w, _) in params]
    widths = [sizes[0]] + [_pad128(d) for d in sizes[1:-1]] + [sizes[-1]]

    flat_args, weight_bytes = [], 0
    for i, (w, b) in enumerate(params):
        din, dout = w.shape
        pin, pout = widths[i], widths[i + 1]
        w_p = jnp.pad(w.astype(jnp.float32), ((0, pin - din), (0, pout - dout)))
        w_p = w_p.astype(param_dtype)
        b_p = jnp.pad(b.astype(jnp.float32), (0, pout - dout)).reshape(1, pout)
        flat_args += [w_p, b_p]
        weight_bytes += w_p.size * w_p.dtype.itemsize + b_p.size * 4

    flat_args = jax.block_until_ready(flat_args)   # materialize now, not per call
    meta = dict(
        n_layers=n_layers,
        widths=tuple(int(v) for v in widths),
        state_dim=int(sizes[0]),
        action_dim=int(sizes[-1]),
        weight_bytes=int(weight_bytes),
    )
    return tuple(flat_args), meta


def _vmem_limits():
    """Generation-aware scoped-VMEM limit + the tiling budget derived from it."""
    phys = None
    try:
        info = pltpu.get_tpu_info()
        phys = getattr(info, "vmem_capacity_bytes", None)
    except Exception:
        phys = None
    if not phys:
        phys = 64 * 1024 * 1024          # conservative fallback: v7x per-TC VMEM
    limit = (int(phys) * 3) // 4         # ~48 MiB on v7x, ~96 MiB on v5e/v6e
    budget = (limit * 3) // 4            # headroom for Mosaic-internal scratch
    return int(budget), int(limit)


def policy_net_forward(s, prepared, *, tile_b=2048, single_block_rows=256):
    """Forward pass of Policy_Net: softmax(MLP(s)), shape (batch, action_dim), f32."""
    flat_args, meta = prepared
    n_layers = meta["n_layers"]
    widths = meta["widths"]
    state_dim = meta["state_dim"]
    action_dim = meta["action_dim"]

    batch, sd = s.shape
    assert sd == state_dim, (sd, state_dim)
    s = s.astype(jnp.float32)

    kernel = _make_policy_kernel(n_layers)
    budget, vmem_limit = _vmem_limits()

    # Advisory cost estimate so XLA schedules the call sensibly in larger graphs.
    flops = 2 * batch * sum(widths[i] * widths[i + 1] for i in range(n_layers))
    cost = pl.CostEstimate(
        flops=int(flops),
        transcendentals=int(batch * action_dim),
        bytes_accessed=int(batch * (state_dim + action_dim) * 4 + meta["weight_bytes"]),
    )

    # ---- tiny-batch path: single grid-less invocation (launch-overhead bound) ----
    if batch <= single_block_rows:
        return pl.pallas_call(
            kernel,
            out_shape=jax.ShapeDtypeStruct((batch, action_dim), jnp.float32),
            in_specs=[pl.BlockSpec(memory_space=pltpu.MemorySpace.VMEM)]
            * (1 + len(flat_args)),
            out_specs=pl.BlockSpec(memory_space=pltpu.MemorySpace.VMEM),
            compiler_params=pltpu.CompilerParams(vmem_limit_bytes=vmem_limit),
            cost_estimate=cost,
        )(s, *flat_args)

    # ---- batched path: grid over batch only, weights/biases pinned in VMEM ----
    tile_b = max(8, (min(tile_b, batch) // 8) * 8)
    # Keep >= 4 grid steps so v7x's 2 TensorCores both get work under
    # dimension_semantics=("parallel",); harmless on single-TC v5e/v6e.
    tile_b = min(tile_b, _round8(pl.cdiv(batch, 4)))

    weight_bytes = meta["weight_bytes"]
    # Constant-index weight blocks never change between steps; if they alone
    # threaten the budget, single-buffer them instead of default double-buffering.
    single_buffer_weights = 2 * weight_bytes > budget // 4
    w_factor = 1 if single_buffer_weights else 2
    max_w = max(widths)
    while tile_b > 8:
        est = (
            2 * tile_b * (state_dim + action_dim) * 4        # in/out tiles (2 bufs)
            + w_factor * weight_bytes                        # resident weights
            + (n_layers + 1) * tile_b * max_w * 4            # live intermediates
        )
        if est <= budget:
            break
        tile_b = max(8, ((tile_b // 2) // 8) * 8)

    nb = pl.cdiv(batch, tile_b)
    batch_p = nb * tile_b
    if batch_p > batch:
        s = jnp.pad(s, ((0, batch_p - batch), (0, 0)))       # rows only (cheap)

    def pinned(shape):
        if single_buffer_weights:
            return pl.BlockSpec(shape, lambda i: (0, 0), pipeline_mode=pl.Buffered(1))
        return pl.BlockSpec(shape, lambda i: (0, 0))

    # Unpadded input DMA: last block dim == full array dim (legal), 64B/row not 512B.
    in_specs = [pl.BlockSpec((tile_b, state_dim), lambda i: (i, 0))]
    for li in range(n_layers):
        pin, pout = widths[li], widths[li + 1]
        in_specs.append(pinned((pin, pout)))                 # pinned W
        in_specs.append(pinned((1, pout)))                   # pinned b
    # Narrow output: only the true action_dim columns ever touch HBM.
    out_specs = pl.BlockSpec((tile_b, action_dim), lambda i: (i, 0))

    out = pl.pallas_call(
        kernel,
        out_shape=jax.ShapeDtypeStruct((batch_p, action_dim), jnp.float32),
        grid_spec=pltpu.PrefetchScalarGridSpec(
            num_scalar_prefetch=0,
            grid=(nb,),
            in_specs=in_specs,
            out_specs=out_specs,
        ),
        compiler_params=pltpu.CompilerParams(
            dimension_semantics=("parallel",),               # shard batch over TCs
            vmem_limit_bytes=vmem_limit,
        ),
        cost_estimate=cost,
    )(s, *flat_args)
    return out[:batch] if batch_p > batch else out


def make_policy_forward(prepared, *, tile_b=2048, single_block_rows=256):
    """Return a jitted forward fn s -> probs (compiles once per batch shape).

    The pre-padded weights are passed as ordinary jit args, so nothing is
    re-padded, re-cast or re-traced per call in an inference loop.
    """
    flat_args, meta = prepared

    @jax.jit
    def _fwd(s, *flat):
        return policy_net_forward(
            s, (flat, meta), tile_b=tile_b, single_block_rows=single_block_rows
        )

    return lambda s: _fwd(s, *flat_args)


def init_policy_params(key, state_dim, action_dim, hid_shape):
    """Deterministic init mimicking nn.Linear's default U(-1/sqrt(fan_in), +...)."""
    layer_sizes = [state_dim] + list(hid_shape) + [action_dim]
    params = []
    for j in range(len(layer_sizes) - 1):
        fan_in, fan_out = layer_sizes[j], layer_sizes[j + 1]
        key, kw, kb = jax.random.split(key, 3)
        bound = 1.0 / jnp.sqrt(jnp.float32(fan_in))
        # Stored as (in, out) == transpose of PyTorch's (out, in) weight.
        w = jax.random.uniform(kw, (fan_in, fan_out), jnp.float32, -bound, bound)
        b = jax.random.uniform(kb, (fan_out,), jnp.float32, -bound, bound)
        params.append((w, b))
    return params


def policy_net_reference(s, params):
    """Pure-JAX reference of Policy_Net.forward for correctness check."""
    x = s
    n = len(params)
    for i, (w, b) in enumerate(params):
        x = x @ w + b
        if i < n - 1:
            x = jnp.maximum(x, 0.0)
    return jax.nn.softmax(x, axis=1)


if __name__ == "__main__":
    # Small shapes consistent with the module: batch of states -> action probs.
    batch = 8
    state_dim = 16
    hid_shape = (32, 32)
    action_dim = 8

    key = jax.random.PRNGKey(0)
    key, ks = jax.random.split(key)
    s = jax.random.normal(ks, (batch, state_dim), jnp.float32)

    params = init_policy_params(key, state_dim, action_dim, hid_shape)
    prepared = prepare_policy_params(params)          # pad/cast weights ONCE

    # Tiny-batch (grid-less) path.
    probs = jax.block_until_ready(policy_net_forward(s, prepared))
    ref = policy_net_reference(s, params)
    assert probs.shape == (batch, action_dim)
    assert jnp.allclose(jnp.sum(probs, axis=1), 1.0, atol=1e-5)
    assert jnp.allclose(probs, ref, atol=1e-5, rtol=1e-5)

    # Batched grid path: unpadded input DMA, narrow output, pinned weights,
    # >=4 grid steps (v7x dual-TC).  Non-multiple batch exercises row padding.
    key, kb = jax.random.split(key)
    s_big = jax.random.normal(kb, (1000, state_dim), jnp.float32)
    fwd = make_policy_forward(prepared)               # jit once, reuse per call
    probs_big = jax.block_until_ready(fwd(s_big))
    ref_big = policy_net_reference(s_big, params)
    assert probs_big.shape == (1000, action_dim)
    assert jnp.allclose(jnp.sum(probs_big, axis=1), 1.0, atol=1e-5)
    assert jnp.allclose(probs_big, ref_big, atol=1e-5, rtol=1e-5)

    print("KERNEL_OK")
</pallas_src>

<mosaic_0001>
module attributes {stable_mosaic.version = 11 : i64} {
  func.func @kernel(%arg0: memref<8x16xf32, #tpu.memory_space<vmem>>, %arg1: memref<16x128xf32, #tpu.memory_space<vmem>>, %arg2: memref<1x128xf32, #tpu.memory_space<vmem>>, %arg3: memref<128x128xf32, #tpu.memory_space<vmem>>, %arg4: memref<1x128xf32, #tpu.memory_space<vmem>>, %arg5: memref<128x8xf32, #tpu.memory_space<vmem>>, %arg6: memref<1x8xf32, #tpu.memory_space<vmem>>, %arg7: memref<8x8xf32, #tpu.memory_space<vmem>>) attributes {dimension_semantics = [], scalar_prefetch = 0 : i64, scratch_operands = 0 : i64, tpu.core_type = #tpu.core_type<tc>} {
    %c0 = arith.constant 0 : index
    %c0_0 = arith.constant 0 : index
    %0 = vector.load %arg0[%c0, %c0_0] : memref<8x16xf32, #tpu.memory_space<vmem>>, vector<8x16xf32>
    %c0_1 = arith.constant 0 : index
    %c0_2 = arith.constant 0 : index
    %1 = vector.load %arg1[%c0_1, %c0_2] : memref<16x128xf32, #tpu.memory_space<vmem>>, vector<16x128xf32>
    %c0_3 = arith.constant 0 : index
    %c0_4 = arith.constant 0 : index
    %2 = vector.load %arg2[%c0_3, %c0_4] : memref<1x128xf32, #tpu.memory_space<vmem>>, vector<1x128xf32>
    %cst = arith.constant dense<0.000000e+00> : vector<8x128xf32>
    %3 = tpu.matmul %0, %1, %cst {dimension_numbers = #tpu.dot_dimension_numbers<[1], [0], [0], [1], [0, 0, 1, 1], [], []>} : vector<8x16xf32>, vector<16x128xf32>, vector<8x128xf32> -> vector<8x128xf32>
    %4 = vector.broadcast %2 : vector<1x128xf32> to vector<8x128xf32>
    %5 = arith.addf %3, %4 : vector<8x128xf32>
    %cst_5 = arith.constant 0.000000e+00 : f32
    %6 = vector.broadcast %cst_5 : f32 to vector<8x128xf32>
    %7 = arith.maximumf %5, %6 : vector<8x128xf32>
    %c0_6 = arith.constant 0 : index
    %c0_7 = arith.constant 0 : index
    %8 = vector.load %arg3[%c0_6, %c0_7] : memref<128x128xf32, #tpu.memory_space<vmem>>, vector<128x128xf32>
    %c0_8 = arith.constant 0 : index
    %c0_9 = arith.constant 0 : index
    %9 = vector.load %arg4[%c0_8, %c0_9] : memref<1x128xf32, #tpu.memory_space<vmem>>, vector<1x128xf32>
    %cst_10 = arith.constant dense<0.000000e+00> : vector<8x128xf32>
    %10 = tpu.matmul %7, %8, %cst_10 {dimension_numbers = #tpu.dot_dimension_numbers<[1], [0], [0], [1], [0, 0, 1, 1], [], []>} : vector<8x128xf32>, vector<128x128xf32>, vector<8x128xf32> -> vector<8x128xf32>
    %11 = vector.broadcast %9 : vector<1x128xf32> to vector<8x128xf32>
    %12 = arith.addf %10, %11 : vector<8x128xf32>
    %cst_11 = arith.constant 0.000000e+00 : f32
    %13 = vector.broadcast %cst_11 : f32 to vector<8x128xf32>
    %14 = arith.maximumf %12, %13 : vector<8x128xf32>
    %c0_12 = arith.constant 0 : index
    %c0_13 = arith.constant 0 : index
    %15 = vector.load %arg5[%c0_12, %c0_13] : memref<128x8xf32, #tpu.memory_space<vmem>>, vector<128x8xf32>
    %c0_14 = arith.constant 0 : index
    %c0_15 = arith.constant 0 : index
    %16 = vector.load %arg6[%c0_14, %c0_15] : memref<1x8xf32, #tpu.memory_space<vmem>>, vector<1x8xf32>
    %cst_16 = arith.constant dense<0.000000e+00> : vector<8x8xf32>
    %17 = tpu.matmul %14, %15, %cst_16 {dimension_numbers = #tpu.dot_dimension_numbers<[1], [0], [0], [1], [0, 0, 1, 1], [], []>} : vector<8x128xf32>, vector<128x8xf32>, vector<8x8xf32> -> vector<8x8xf32>
    %18 = vector.broadcast %16 : vector<1x8xf32> to vector<8x8xf32>
    %19 = arith.addf %17, %18 : vector<8x8xf32>
    %cst_17 = arith.constant dense<0xFF800000> : vector<8xf32>
    %20 = vector.multi_reduction <maximumf>, %19, %cst_17 [1] : vector<8x8xf32> to vector<8xf32>
    %21 = vector.shape_cast %20 : vector<8xf32> to vector<8x1xf32>
    %22 = vector.broadcast %21 : vector<8x1xf32> to vector<8x8xf32>
    %23 = arith.subf %19, %22 : vector<8x8xf32>
    %24 = math.exp %23 : vector<8x8xf32>
    %cst_18 = arith.constant dense<0.000000e+00> : vector<8xf32>
    %25 = vector.multi_reduction <add>, %24, %cst_18 [1] : vector<8x8xf32> to vector<8xf32>
    %26 = vector.shape_cast %25 : vector<8xf32> to vector<8x1xf32>
    %27 = tpu.reciprocal %26 {approx = true} : vector<8x1xf32> -> vector<8x1xf32>
    %28 = arith.mulf %26, %27 : vector<8x1xf32>
    %cst_19 = arith.constant 2.000000e+00 : f32
    %29 = vector.broadcast %cst_19 : f32 to vector<8x1xf32>
    %30 = arith.subf %29, %28 : vector<8x1xf32>
    %31 = arith.mulf %27, %30 : vector<8x1xf32>
    %32 = vector.broadcast %31 : vector<8x1xf32> to vector<8x8xf32>
    %33 = arith.mulf %24, %32 : vector<8x8xf32>
    %c0_20 = arith.constant 0 : index
    %c0_21 = arith.constant 0 : index
    %34 = vector.load %arg7[%c0_20, %c0_21] : memref<8x8xf32, #tpu.memory_space<vmem>>, vector<8x8xf32>
    tpu.vector_store %arg7[%c0_20, %c0_21], %33 {strides = array<i32>} : memref<8x8xf32, #tpu.memory_space<vmem>>, vector<8x8xf32>,
    return
  }
}

</mosaic_0001>

<llo_original>
// kernel: tpu_custom_call.1
$region0: #{tpu_custom_call.1}
  #allocation0 [shape = 'u32[]', space=smem, size = 0x4, offset = 0x4, fixed_abs, tag = 'smem constant byte address 0x4 - core index']
  #allocation1 [shape = 'u32[144,128]{1,0:T(1,128)}', space=vmem, size = 0x12000, scoped, tag = 'internal scratch']
  %s0 = inlined_call_operand.hbm [shape: f32[8,16], index: 0, kind: input, shape index: {}]
  %s1 = inlined_call_operand.vmem [shape: f32[16,128], index: 1, kind: input, shape index: {}]
  %s2 = inlined_call_operand.vmem [shape: f32[1,128], index: 2, kind: input, shape index: {}]
  %s3 = inlined_call_operand.vmem [shape: f32[128,128], index: 3, kind: input, shape index: {}]
  %s4 = inlined_call_operand.vmem [shape: f32[1,128], index: 4, kind: input, shape index: {}]
  %s5 = inlined_call_operand.vmem [shape: f32[128,8], index: 5, kind: input, shape index: {}]
  %s6 = inlined_call_operand.vmem [shape: f32[1,8], index: 6, kind: input, shape index: {}]
  %s7 = inlined_call_operand.hbm [shape: f32[8,8], index: 7, kind: output, shape index: {}]
  %s8 = sld [smem:[#allocation0]]
  $region42: #{tpu_custom_call.1} parent=0
    _
  %s10 = ssub.s32 1, %s8
  %s11 = scalar_select 0, %s10, %s8
  $region1: #{tpu_custom_call.1} parent=0
    #allocation2 [shape = 'u8[4096]{0}', space=vmem, size = 0x1000, scoped, tag = 'input window, operand 0, single buffered']
    #allocation3 [shape = 's32[1]{0}', space=sflag, size = 0x4, scoped, tag = 'scoped memory for tpu_custom_call.1']
    #allocation4 [shape = 's32[1]{0}', space=sflag, size = 0x4, scoped, tag = 'scoped memory for tpu_custom_call.1']
    #allocation5 [shape = 'u8[4096]{0}', space=vmem, size = 0x1000, scoped, tag = 'output window, operand 0, single buffered']
    %12 = vsyncpa [#allocation3], 0
    %13 = vsyncpa [#allocation4], 0
    // Predicated region
    $region2: #{tpu_custom_call.1} parent=1 // pred_check
      _
    $region3: #{tpu_custom_call.1} parent=1 // pred_check_branch
      %15 = sbr.rel (0) target = $region5
    $region4: #{tpu_custom_call.1} parent=1 // pred_region
      %s17 = ssub.s32 128, 128
      %18 = vsyncadd [#allocation3], %s17
      %s20 = sshll.u32 [#allocation2], 4
      %s21 = int_to_ptr.vmem [resolvable:$true] %s20
      %23 = dma.hbm_to_vmem [thread:$0]  %s0, 128, %s21, [#allocation3]
    $region5: #{tpu_custom_call.1} parent=1 // pred_fallthru
      _
    // Predicated region
    $region6: #{tpu_custom_call.1} parent=1 // pred_check
      _
    $region7: #{tpu_custom_call.1} parent=1 // pred_check_branch
      %25 = sbr.rel (0) target = $region9
    $region8: #{tpu_custom_call.1} parent=1 // pred_region
      _
    $region9: #{tpu_custom_call.1} parent=1 // pred_fallthru
      _
    // Predicated region
    $region10: #{tpu_custom_call.1} parent=1 // pred_check
      _
    $region11: #{tpu_custom_call.1} parent=1 // pred_check_branch
      %27 = sbr.rel (0) target = $region13
    $region12: #{tpu_custom_call.1} parent=1 // pred_region
      _
    $region13: #{tpu_custom_call.1} parent=1 // pred_fallthru
      _
    // Predicated region
    $region14: #{tpu_custom_call.1} parent=1 // pred_check
      _
    $region15: #{tpu_custom_call.1} parent=1 // pred_check_branch
      %29 = sbr.rel (0) target = $region17
    $region16: #{tpu_custom_call.1} parent=1 // pred_region
      _
    $region17: #{tpu_custom_call.1} parent=1 // pred_fallthru
      _
    // Predicated region
    $region18: #{tpu_custom_call.1} parent=1 // pred_check
      _
    $region19: #{tpu_custom_call.1} parent=1 // pred_check_branch
      %31 = sbr.rel (0) target = $region21
    $region20: #{tpu_custom_call.1} parent=1 // pred_region
      _
    $region21: #{tpu_custom_call.1} parent=1 // pred_fallthru
      _
    // Predicated region
    $region22: #{tpu_custom_call.1} parent=1 // pred_check
      _
    $region23: #{tpu_custom_call.1} parent=1 // pred_check_branch
      %33 = sbr.rel (0) target = $region25
    $region24: #{tpu_custom_call.1} parent=1 // pred_region
      _
    $region25: #{tpu_custom_call.1} parent=1 // pred_fallthru
      _
    // Predicated region
    $region26: #{tpu_custom_call.1} parent=1 // pred_check
      _
    $region27: #{tpu_custom_call.1} parent=1 // pred_check_branch
      %35 = sbr.rel (0) target = $region29
    $region28: #{tpu_custom_call.1} parent=1 // pred_region
      _
    $region29: #{tpu_custom_call.1} parent=1 // pred_fallthru
      _
    // Predicated region
    $region30: #{tpu_custom_call.1} parent=1 // pred_check
      _
    $region31: #{tpu_custom_call.1} parent=1 // pred_check_branch
      %37 = sbr.rel (0) target = $region33
    $region32: #{tpu_custom_call.1} parent=1 // pred_region
      %38 = dma.done [#allocation3], 128
    $region33: #{tpu_custom_call.1} parent=1 // pred_fallthru
      _
    %v39 = vld [vmem:[#allocation2] sm:$0xff]
    %v40 = vld [vmem:[%s1] sm:$0xff]
    %v41 = vld [vmem:[%s1 + $0x8] sm:$0xff]
    %v42 = vld [vmem:[%s2] sm:$0x1]
    %v44 = vlaneseq
    %v45 = vshrl.u32 %v44, 7
    %v46 = vsub.s32 0, %v45
    %v47 = vrot.slane %v42, %v46
    %vm49 = vcmask 130048
    %v51 = vsel %vm49, %v39, 0
    %53 = vmatprep.subr.mxu0 0.0
    %54 = vmatpush1.msra.mxu0 %v40
    %55 = vmatprep.subr.mxu0 0.0
    %56 = vmatpush1.msra.mxu0 %v41
    %57 = vmatprep.subr.mxu0 0.0
    %58 = vmatpush1.msra.mxu0 0.0
    %59 = vmatprep.subr.mxu0 0.0
    %60 = vmatpush1.msra.mxu0 0.0
    %61 = vmatprep.subr.mxu0 0.0
    %62 = vmatpush1.msra.mxu0 0.0
    %63 = vmatprep.subr.mxu0 0.0
    %64 = vmatpush1.msra.mxu0 0.0
    %65 = vmatprep.subr.mxu0 0.0
    %66 = vmatpush1.msra.mxu0 0.0
    %67 = vmatprep.subr.mxu0 0.0
    %68 = vmatpush1.msra.mxu0 0.0
    %69 = vmatprep.subr.mxu0 0.0
    %70 = vmatpush1.msra.mxu0 0.0
    %71 = vmatprep.subr.mxu0 0.0
    %72 = vmatpush1.msra.mxu0 0.0
    %73 = vmatprep.subr.mxu0 0.0
    %74 = vmatpush1.msra.mxu0 0.0
    %75 = vmatprep.subr.mxu0 0.0
    %76 = vmatpush1.msra.mxu0 0.0
    %77 = vmatprep.subr.mxu0 0.0
    %78 = vmatpush1.msra.mxu0 0.0
    %79 = vmatprep.subr.mxu0 0.0
    %80 = vmatpush1.msra.mxu0 0.0
    %81 = vmatprep.subr.mxu0 0.0
    %82 = vmatpush1.msra.mxu0 0.0
    %83 = vmatprep.subr.mxu0 0.0
    %84 = vmatpush1.msra.mxu0 0.0
    %85 = vmatprep.subr.mxu0 0.0
    %86 = vmatpush1.msra.mxu0 0.0
    %87 = vmatprep.subr.mxu0 0.0
    %88 = vmatpush1.msra.mxu0 0.0
    %89 = vmatprep.subr.mxu0 0.0
    %90 = vmatpush1.msra.mxu0 0.0
    %91 = vmatprep.subr.mxu0 0.0
    %92 = vmatpush1.msra.mxu0 0.0
    %93 = vmatprep.subr.mxu0 0.0
    %94 = vmatpush1.msra.mxu0 0.0
    %95 = vmatprep.subr.mxu0 0.0
    %96 = vmatpush1.msra.mxu0 0.0
    %97 = vmatprep.subr.mxu0 0.0
    %98 = vmatpush1.msra.mxu0 0.0
    %99 = vmatprep.subr.mxu0 0.0
    %100 = vmatpush1.msra.mxu0 0.0
    %101 = vmatprep.subr.mxu0 0.0
    %102 = vmatpush1.msra.mxu0 0.0
    %103 = vmatprep.subr.mxu0 0.0
    %104 = vmatpush1.msra.mxu0 0.0
    %105 = vmatprep.subr.mxu0 0.0
    %106 = vmatpush1.msra.mxu0 0.0
    %107 = vmatprep.subr.mxu0 0.0
    %108 = vmatpush1.msra.mxu0 0.0
    %109 = vmatprep.subr.mxu0 0.0
    %110 = vmatpush1.msra.mxu0 0.0
    %111 = vmatprep.subr.mxu0 0.0
    %112 = vmatpush1.msra.mxu0 0.0
    %113 = vmatprep.subr.mxu0 0.0
    %114 = vmatpush1.msra.mxu0 0.0
    %115 = vmatprep.subr.mxu0 0.0
    %116 = vmatpush1.msra.mxu0 0.0
    %117 = vmatprep.mubr.f32.mxu0 0.0
    %118 = vmatmul.mubr.f32.gmra.mrb[0].mxu0 %v51
    %v119 = vpop.f32.mrb[0].mxu0
    %v120 = vadd.f32 %v47, %v119
    %v121 = vpop.f32.mrb[0].mxu0
    %122 = vdwg.mxu0
    %v123 = vmax.f32 %v120, 0.0
    %v124 = vld [vmem:[%s3] sm:$0xff]
    %v125 = vld [vmem:[%s3 + $0x8] sm:$0xff]
    %v126 = vld [vmem:[%s3 + $0x10] sm:$0xff]
    %v127 = vld [vmem:[%s3 + $0x18] sm:$0xff]
    %v128 = vld [vmem:[%s3 + $0x20] sm:$0xff]
    %v129 = vld [vmem:[%s3 + $0x28] sm:$0xff]
    %v130 = vld [vmem:[%s3 + $0x30] sm:$0xff]
    %v131 = vld [vmem:[%s3 + $0x38] sm:$0xff]
    %v132 = vld [vmem:[%s3 + $0x40] sm:$0xff]
    %v133 = vld [vmem:[%s3 + $0x48] sm:$0xff]
    %v134 = vld [vmem:[%s3 + $0x50] sm:$0xff]
    %v135 = vld [vmem:[%s3 + $0x58] sm:$0xff]
    %v136 = vld [vmem:[%s3 + $0x60] sm:$0xff]
    %v137 = vld [vmem:[%s3 + $0x68] sm:$0xff]
    %v138 = vld [vmem:[%s3 + $0x70] sm:$0xff]
    %v139 = vld [vmem:[%s3 + $0x78] sm:$0xff]
    %v140 = vld [vmem:[%s4] sm:$0x1]
    %v142 = vlaneseq
    %v143 = vshrl.u32 %v142, 7
    %v144 = vsub.s32 0, %v143
    %v145 = vrot.slane %v140, %v144
    %147 = vmatprep.subr.mxu0 0.0
    %148 = vmatpush1.msra.mxu0 %v124
    %149 = vmatprep.subr.mxu0 0.0
    %150 = vmatpush1.msra.mxu0 %v125
    %151 = vmatprep.subr.mxu0 0.0
    %152 = vmatpush1.msra.mxu0 %v126
    %153 = vmatprep.subr.mxu0 0.0
    %154 = vmatpush1.msra.mxu0 %v127
    %155 = vmatprep.subr.mxu0 0.0
    %156 = vmatpush1.msra.mxu0 %v128
    %157 = vmatprep.subr.mxu0 0.0
    %158 = vmatpush1.msra.mxu0 %v129
    %159 = vmatprep.subr.mxu0 0.0
    %160 = vmatpush1.msra.mxu0 %v130
    %161 = vmatprep.subr.mxu0 0.0
    %162 = vmatpush1.msra.mxu0 %v131
    %163 = vmatprep.subr.mxu0 0.0
    %164 = vmatpush1.msra.mxu0 %v132
    %165 = vmatprep.subr.mxu0 0.0
    %166 = vmatpush1.msra.mxu0 %v133
    %167 = vmatprep.subr.mxu0 0.0
    %168 = vmatpush1.msra.mxu0 %v134
    %169 = vmatprep.subr.mxu0 0.0
    %170 = vmatpush1.msra.mxu0 %v135
    %171 = vmatprep.subr.mxu0 0.0
    %172 = vmatpush1.msra.mxu0 %v136
    %173 = vmatprep.subr.mxu0 0.0
    %174 = vmatpush1.msra.mxu0 %v137
    %175 = vmatprep.subr.mxu0 0.0
    %176 = vmatpush1.msra.mxu0 %v138
    %177 = vmatprep.subr.mxu0 0.0
    %178 = vmatpush1.msra.mxu0 %v139
    %179 = vmatprep.subr.mxu0 0.0
    %180 = vmatpush1.msra.mxu0 0.0
    %181 = vmatprep.subr.mxu0 0.0
    %182 = vmatpush1.msra.mxu0 0.0
    %183 = vmatprep.subr.mxu0 0.0
    %184 = vmatpush1.msra.mxu0 0.0
    %185 = vmatprep.subr.mxu0 0.0
    %186 = vmatpush1.msra.mxu0 0.0
    %187 = vmatprep.subr.mxu0 0.0
    %188 = vmatpush1.msra.mxu0 0.0
    %189 = vmatprep.subr.mxu0 0.0
    %190 = vmatpush1.msra.mxu0 0.0
    %191 = vmatprep.subr.mxu0 0.0
    %192 = vmatpush1.msra.mxu0 0.0
    %193 = vmatprep.subr.mxu0 0.0
    %194 = vmatpush1.msra.mxu0 0.0
    %195 = vmatprep.subr.mxu0 0.0
    %196 = vmatpush1.msra.mxu0 0.0
    %197 = vmatprep.subr.mxu0 0.0
    %198 = vmatpush1.msra.mxu0 0.0
    %199 = vmatprep.subr.mxu0 0.0
    %200 = vmatpush1.msra.mxu0 0.0
    %201 = vmatprep.subr.mxu0 0.0
    %202 = vmatpush1.msra.mxu0 0.0
    %203 = vmatprep.subr.mxu0 0.0
    %204 = vmatpush1.msra.mxu0 0.0
    %205 = vmatprep.subr.mxu0 0.0
    %206 = vmatpush1.msra.mxu0 0.0
    %207 = vmatprep.subr.mxu0 0.0
    %208 = vmatpush1.msra.mxu0 0.0
    %209 = vmatprep.subr.mxu0 0.0
    %210 = vmatpush1.msra.mxu0 0.0
    %211 = vmatprep.mubr.f32.mxu0 0.0
    %212 = vmatmul.mubr.f32.gmra.mrb[0].mxu0 %v123
    %v213 = vpop.f32.mrb[0].mxu0
    %v214 = vadd.f32 %v145, %v213
    %v215 = vpop.f32.mrb[0].mxu0
    %216 = vdwg.mxu0
    %v217 = vmax.f32 %v214, 0.0
    %v218 = vld [vmem:[%s5] sm:$0xff]
    %v219 = vld [vmem:[%s5 + $0x8] sm:$0xff]
    %v220 = vld [vmem:[%s5 + $0x10] sm:$0xff]
    %v221 = vld [vmem:[%s5 + $0x18] sm:$0xff]
    %v222 = vld [vmem:[%s5 + $0x20] sm:$0xff]
    %v223 = vld [vmem:[%s5 + $0x28] sm:$0xff]
    %v224 = vld [vmem:[%s5 + $0x30] sm:$0xff]
    %v225 = vld [vmem:[%s5 + $0x38] sm:$0xff]
    %v226 = vld [vmem:[%s5 + $0x40] sm:$0xff]
    %v227 = vld [vmem:[%s5 + $0x48] sm:$0xff]
    %v228 = vld [vmem:[%s5 + $0x50] sm:$0xff]
    %v229 = vld [vmem:[%s5 + $0x58] sm:$0xff]
    %v230 = vld [vmem:[%s5 + $0x60] sm:$0xff]
    %v231 = vld [vmem:[%s5 + $0x68] sm:$0xff]
    %v232 = vld [vmem:[%s5 + $0x70] sm:$0xff]
    %v233 = vld [vmem:[%s5 + $0x78] sm:$0xff]
    %v234 = vld [vmem:[%s6] sm:$0x1]
    %v236 = vlaneseq
    %v237 = vshrl.u32 %v236, 7
    %v238 = vsub.s32 0, %v237
    %v239 = vrot.slane %v234, %v238
    %241 = vmatprep.subr.mxu0 0.0
    %242 = vmatpush1.msra.mxu0 %v218
    %243 = vmatprep.subr.mxu0 0.0
    %244 = vmatpush1.msra.mxu0 %v219
    %245 = vmatprep.subr.mxu0 0.0
    %246 = vmatpush1.msra.mxu0 %v220
    %247 = vmatprep.subr.mxu0 0.0
    %248 = vmatpush1.msra.mxu0 %v221
    %249 = vmatprep.subr.mxu0 0.0
    %250 = vmatpush1.msra.mxu0 %v222
    %251 = vmatprep.subr.mxu0 0.0
    %252 = vmatpush1.msra.mxu0 %v223
    %253 = vmatprep.subr.mxu0 0.0
    %254 = vmatpush1.msra.mxu0 %v224
    %255 = vmatprep.subr.mxu0 0.0
    %256 = vmatpush1.msra.mxu0 %v225
    %257 = vmatprep.subr.mxu0 0.0
    %258 = vmatpush1.msra.mxu0 %v226
    %259 = vmatprep.subr.mxu0 0.0
    %260 = vmatpush1.msra.mxu0 %v227
    %261 = vmatprep.subr.mxu0 0.0
    %262 = vmatpush1.msra.mxu0 %v228
    %263 = vmatprep.subr.mxu0 0.0
    %264 = vmatpush1.msra.mxu0 %v229
    %265 = vmatprep.subr.mxu0 0.0
    %266 = vmatpush1.msra.mxu0 %v230
    %267 = vmatprep.subr.mxu0 0.0
    %268 = vmatpush1.msra.mxu0 %v231
    %269 = vmatprep.subr.mxu0 0.0
    %270 = vmatpush1.msra.mxu0 %v232
    %271 = vmatprep.subr.mxu0 0.0
    %272 = vmatpush1.msra.mxu0 %v233
    %273 = vmatprep.subr.mxu0 0.0
    %274 = vmatpush1.msra.mxu0 0.0
    %275 = vmatprep.subr.mxu0 0.0
    %276 = vmatpush1.msra.mxu0 0.0
    %277 = vmatprep.subr.mxu0 0.0
    %278 = vmatpush1.msra.mxu0 0.0
    %279 = vmatprep.subr.mxu0 0.0
    %280 = vmatpush1.msra.mxu0 0.0
    %281 = vmatprep.subr.mxu0 0.0
    %282 = vmatpush1.msra.mxu0 0.0
    %283 = vmatprep.subr.mxu0 0.0
    %284 = vmatpush1.msra.mxu0 0.0
    %285 = vmatprep.subr.mxu0 0.0
    %286 = vmatpush1.msra.mxu0 0.0
    %287 = vmatprep.subr.mxu0 0.0
    %288 = vmatpush1.msra.mxu0 0.0
    %289 = vmatprep.subr.mxu0 0.0
    %290 = vmatpush1.msra.mxu0 0.0
    %291 = vmatprep.subr.mxu0 0.0
    %292 = vmatpush1.msra.mxu0 0.0
    %293 = vmatprep.subr.mxu0 0.0
    %294 = vmatpush1.msra.mxu0 0.0
    %295 = vmatprep.subr.mxu0 0.0
    %296 = vmatpush1.msra.mxu0 0.0
    %297 = vmatprep.subr.mxu0 0.0
    %298 = vmatpush1.msra.mxu0 0.0
    %299 = vmatprep.subr.mxu0 0.0
    %300 = vmatpush1.msra.mxu0 0.0
    %301 = vmatprep.subr.mxu0 0.0
    %302 = vmatpush1.msra.mxu0 0.0
    %303 = vmatprep.subr.mxu0 0.0
    %304 = vmatpush1.msra.mxu0 0.0
    %305 = vmatprep.mubr.f32.mxu0 0.0
    %306 = vmatmul.mubr.f32.gmra.mrb[0].mxu0 %v217
    %v307 = vpop.f32.mrb[0].mxu0
    %v308 = vadd.f32 %v239, %v307
    %v309 = vpop.f32.mrb[0].mxu0
    %310 = vdwg.mxu0
    %vm311 = vcmask 64512
    %v312 = vsel %vm311, %v308, -inf
    %313 = vmax.xlane.f32.xlu0 %v312
    %v314 = vpop.xlane.xlu0 %313
    %v315 = vsub.f32 %v308, %v314
    %v316 = vmul.f32 %v315, 1.442695
    %v317 = vpow.pop %v316
    %v318 = vsel %vm311, %v317, 0.0
    %319 = vadd.xlane.f32.xlu0 %v318
    %v320 = vpop.xlane.xlu0 %319
    %v321 = vrcp.pop %v320
    %v322 = vmul.f32 %v320, %v321
    %v323 = vsub.f32 2.0, %v322
    %v324 = vmul.f32 %v321, %v323
    %v325 = vmul.f32 %v317, %v324
    %326 = vst.msk [vmem:[#allocation5] sm:$0xff] %vm311, %v325
    // Predicated region
    $region34: #{tpu_custom_call.1} parent=1 // pred_check
      _
    $region35: #{tpu_custom_call.1} parent=1 // pred_check_branch
      %328 = sbr.rel (0) target = $region37
    $region36: #{tpu_custom_call.1} parent=1 // pred_region
      %s330 = ssub.s32 128, 128
      %331 = vsyncadd [#allocation4], %s330
      %s333 = sshll.u32 [#allocation5], 4
      %s334 = int_to_ptr.vmem [resolvable:$true] %s333
      %336 = dma.vmem_to_hbm [thread:$0]  %s334, 128, %s7, [#allocation4]
    $region37: #{tpu_custom_call.1} parent=1 // pred_fallthru
      _
    // Predicated region
    $region38: #{tpu_custom_call.1} parent=1 // pred_check
      _
    $region39: #{tpu_custom_call.1} parent=1 // pred_check_branch
      %338 = sbr.rel (0) target = $region41
    $region40: #{tpu_custom_call.1} parent=1 // pred_region
      %339 = dma.done [#allocation4], 128
    $region41: #{tpu_custom_call.1} parent=1 // pred_fallthru
      _
    %340 = vsyncpa [#allocation3], 1
    %341 = vsyncpa [#allocation4], 1

</llo_original>
